<compile_context>
chip_gen: v6e
topology: v6e:2x2x1
jax: 0.10.0
libtpu: 0.0.40
codegen_flags: <defaults>
</compile_context>

<pallas_src>
import functools

import jax
import jax.numpy as jnp
import numpy as np
from jax.experimental import pallas as pl
from jax.experimental.pallas import tpu as pltpu

IC, OC, KH, KW = 3, 6, 3, 3  # Conv2d(3, 6, kernel_size=3, stride=1, padding=0)
NTAPS = IC * KH * KW


def _conv2d_flat_kernel(w_ref, b_ref, x_ref, o_ref, *, img_w):
    # w_ref: (1, OC, NTAPS) f32 VMEM; w[0, oc, (ic*KH+kh)*KW+kw] = weight[oc,ic,kh,kw]
    # b_ref: (1, OC, 1)   f32 VMEM
    # x_ref: (NB, IC, H*W)     VMEM  -- NCHW input with (H, W) flattened onto lanes
    # o_ref: (NB, OC, L)       VMEM  -- L = (OH-1)*W + OW; lane p = oh*W + ow holds
    #                                   the valid conv output; the few lanes with
    #                                   ow >= OW are junk the wrapper slices away.
    NB = x_ref.shape[0]
    L = o_ref.shape[-1]

    # Bias folded into the accumulator init (fused epilogue, f32 accumulation).
    acc = jnp.zeros((NB, OC, L), jnp.float32) + b_ref[...]

    # 27 taps = 27 broadcast FMAs on dense vregs (VPU only; no MXU, no reshapes).
    for ic in range(IC):
        for kh in range(KH):
            for kw in range(KW):
                s = kh * img_w + kw                      # static lane shift
                tap = (ic * KH + kh) * KW + kw
                win = x_ref[:, ic:ic + 1, s:s + L]       # (NB, 1, L) shifted window
                wcol = w_ref[:, :, tap:tap + 1]          # (1, OC, 1) per-tap weights
                acc = acc + wcol * win                   # -> (NB, OC, L)

    o_ref[...] = acc.astype(o_ref.dtype)                 # single dense store


def _tensorcores_per_chip() -> int:
    """Best-effort TCs-per-chip query (v7x: 2, v5e/v6e: 1).  Safe fallback to 1;
    a wrong guess only changes batch chunking, never correctness."""
    try:
        info = pltpu.get_tpu_info()
        for attr in ("num_cores", "cores_per_chip", "num_tensorcores",
                     "tensorcores_per_chip"):
            v = getattr(info, attr, None)
            if isinstance(v, int) and v > 0:
                return v
    except Exception:
        pass
    return 1


def conv2d_pallas(x_nchw, weight_oihw, bias, *, batch_block=None):
    """Conv2d(3->6, k=3, s=1, p=0). x: (N,3,H,W) NCHW; weight: (6,3,3,3) OIHW; bias: (6,)."""
    N, C, H, W = x_nchw.shape
    assert C == IC
    OH, OW = H - KH + 1, W - KW + 1
    HW = H * W
    L = (OH - 1) * W + OW            # lane-dense output slab width (222 for 16x16)

    if batch_block is None:
        # One grid step per TensorCore on dual-TC chips (v7x); single whole-batch
        # step on single-TC chips where the ~0.35us per-step overhead dominates.
        n_tc = _tensorcores_per_chip()
        batch_block = N // n_tc if (n_tc > 1 and N % n_tc == 0) else N
    NB = max(1, batch_block)
    assert N % NB == 0, "batch_block must divide N"

    x_flat = x_nchw.reshape(N, IC, HW)            # contiguous reshape, free
    w_flat = weight_oihw.reshape(1, OC, NTAPS)    # (1, 6, 27), OIHW row-major taps
    b_col = bias.reshape(1, OC, 1)

    out_flat = pl.pallas_call(
        functools.partial(_conv2d_flat_kernel, img_w=W),
        out_shape=jax.ShapeDtypeStruct((N, OC, L), x_nchw.dtype),
        grid_spec=pltpu.PrefetchScalarGridSpec(
            num_scalar_prefetch=0,
            grid=(N // NB,),
            in_specs=[
                pl.BlockSpec((1, OC, NTAPS), lambda n: (0, 0, 0)),   # weights (resident)
                pl.BlockSpec((1, OC, 1), lambda n: (0, 0, 0)),       # bias    (resident)
                pl.BlockSpec((NB, IC, HW), lambda n: (n, 0, 0)),     # input batch chunk
            ],
            out_specs=pl.BlockSpec((NB, OC, L), lambda n: (n, 0, 0)),
        ),
        compiler_params=pltpu.CompilerParams(
            dimension_semantics=("parallel",),
        ),
    )(w_flat, b_col, x_flat)

    # Free layout plumbing back to NCHW: pad the W-strided slab to OH*W lanes,
    # reshape, and drop the (W - OW) junk columns.
    out = jnp.pad(out_flat, ((0, 0), (0, 0), (0, OH * W - L)))
    return out.reshape(N, OC, OH, W)[:, :, :, :OW]


if __name__ == "__main__":
    key = jax.random.PRNGKey(0)
    k_w, k_b, k_x = jax.random.split(key, 3)

    # Deterministic parameter init (mimics PyTorch's U(-1/sqrt(fan_in), 1/sqrt(fan_in))).
    fan_in = IC * KH * KW
    bound = 1.0 / np.sqrt(fan_in)
    weight = jax.random.uniform(k_w, (OC, IC, KH, KW), jnp.float32, -bound, bound)
    bias = jax.random.uniform(k_b, (OC,), jnp.float32, -bound, bound)

    # Small input consistent with Conv2d(3, 6, 3): NCHW = (2, 3, 16, 16)
    x = jax.random.normal(k_x, (2, IC, 16, 16), dtype=jnp.float32)

    out = jax.block_until_ready(conv2d_pallas(x, weight, bias))

    # Sanity check against XLA's conv (same NCHW/OIHW semantics as PyTorch).
    ref = jax.lax.conv_general_dilated(
        x, weight, window_strides=(1, 1), padding="VALID",
        dimension_numbers=("NCHW", "OIHW", "NCHW")) + bias.reshape(1, OC, 1, 1)
    assert out.shape == (2, OC, 14, 14)
    np.testing.assert_allclose(np.asarray(out), np.asarray(ref), rtol=1e-5, atol=1e-5)

    print("KERNEL_OK")
</pallas_src>

<mosaic_0001>
module attributes {stable_mosaic.version = 11 : i64} {
  func.func @_conv2d_flat_kernel(%arg0: i32, %arg1: memref<1x6x27xf32, #tpu.memory_space<vmem>>, %arg2: memref<1x6x1xf32, #tpu.memory_space<vmem>>, %arg3: memref<2x3x256xf32, #tpu.memory_space<vmem>>, %arg4: memref<2x6x222xf32, #tpu.memory_space<vmem>>) attributes {dimension_semantics = [#tpu.dimension_semantics<parallel>], iteration_bounds = array<i64: 1>, scalar_prefetch = 0 : i64, scratch_operands = 0 : i64, tpu.core_type = #tpu.core_type<tc>, window_params = [{pipeline_mode = #tpu.pipeline_mode<synchronous>, transform_indices = @transform_0, window_bounds = array<i64: 1, 6, 27>}, {pipeline_mode = #tpu.pipeline_mode<synchronous>, transform_indices = @transform_1, window_bounds = array<i64: 1, 6, 1>}, {transform_indices = @transform_2, window_bounds = array<i64: 2, 3, 256>}, {transform_indices = @transform_3, window_bounds = array<i64: 2, 6, 222>}]} {
    %cst = arith.constant 0.000000e+00 : f32
    %0 = vector.broadcast %cst : f32 to vector<2x6x222xf32>
    %c0 = arith.constant 0 : index
    %c0_0 = arith.constant 0 : index
    %c0_1 = arith.constant 0 : index
    %1 = vector.load %arg2[%c0, %c0_0, %c0_1] : memref<1x6x1xf32, #tpu.memory_space<vmem>>, vector<1x6x1xf32>
    %2 = vector.broadcast %1 : vector<1x6x1xf32> to vector<2x6x222xf32>
    %3 = arith.addf %0, %2 : vector<2x6x222xf32>
    %c0_2 = arith.constant 0 : index
    %c0_3 = arith.constant 0 : index
    %c0_4 = arith.constant 0 : index
    %4 = vector.load %arg3[%c0_2, %c0_3, %c0_4] : memref<2x3x256xf32, #tpu.memory_space<vmem>>, vector<2x1x222xf32>
    %c0_5 = arith.constant 0 : index
    %c0_6 = arith.constant 0 : index
    %c0_7 = arith.constant 0 : index
    %5 = vector.load %arg1[%c0_5, %c0_6, %c0_7] : memref<1x6x27xf32, #tpu.memory_space<vmem>>, vector<1x6x1xf32>
    %6 = vector.broadcast %5 : vector<1x6x1xf32> to vector<2x6x222xf32>
    %7 = vector.broadcast %4 : vector<2x1x222xf32> to vector<2x6x222xf32>
    %8 = arith.mulf %6, %7 : vector<2x6x222xf32>
    %9 = arith.addf %3, %8 : vector<2x6x222xf32>
    %c0_8 = arith.constant 0 : index
    %c0_9 = arith.constant 0 : index
    %c1 = arith.constant 1 : index
    %10 = vector.load %arg3[%c0_8, %c0_9, %c1] : memref<2x3x256xf32, #tpu.memory_space<vmem>>, vector<2x1x222xf32>
    %c0_10 = arith.constant 0 : index
    %c0_11 = arith.constant 0 : index
    %c1_12 = arith.constant 1 : index
    %11 = vector.load %arg1[%c0_10, %c0_11, %c1_12] : memref<1x6x27xf32, #tpu.memory_space<vmem>>, vector<1x6x1xf32>
    %12 = vector.broadcast %11 : vector<1x6x1xf32> to vector<2x6x222xf32>
    %13 = vector.broadcast %10 : vector<2x1x222xf32> to vector<2x6x222xf32>
    %14 = arith.mulf %12, %13 : vector<2x6x222xf32>
    %15 = arith.addf %9, %14 : vector<2x6x222xf32>
    %c0_13 = arith.constant 0 : index
    %c0_14 = arith.constant 0 : index
    %c2 = arith.constant 2 : index
    %16 = vector.load %arg3[%c0_13, %c0_14, %c2] : memref<2x3x256xf32, #tpu.memory_space<vmem>>, vector<2x1x222xf32>
    %c0_15 = arith.constant 0 : index
    %c0_16 = arith.constant 0 : index
    %c2_17 = arith.constant 2 : index
    %17 = vector.load %arg1[%c0_15, %c0_16, %c2_17] : memref<1x6x27xf32, #tpu.memory_space<vmem>>, vector<1x6x1xf32>
    %18 = vector.broadcast %17 : vector<1x6x1xf32> to vector<2x6x222xf32>
    %19 = vector.broadcast %16 : vector<2x1x222xf32> to vector<2x6x222xf32>
    %20 = arith.mulf %18, %19 : vector<2x6x222xf32>
    %21 = arith.addf %15, %20 : vector<2x6x222xf32>
    %c0_18 = arith.constant 0 : index
    %c0_19 = arith.constant 0 : index
    %c16 = arith.constant 16 : index
    %22 = vector.load %arg3[%c0_18, %c0_19, %c16] : memref<2x3x256xf32, #tpu.memory_space<vmem>>, vector<2x1x222xf32>
    %c0_20 = arith.constant 0 : index
    %c0_21 = arith.constant 0 : index
    %c3 = arith.constant 3 : index
    %23 = vector.load %arg1[%c0_20, %c0_21, %c3] : memref<1x6x27xf32, #tpu.memory_space<vmem>>, vector<1x6x1xf32>
    %24 = vector.broadcast %23 : vector<1x6x1xf32> to vector<2x6x222xf32>
    %25 = vector.broadcast %22 : vector<2x1x222xf32> to vector<2x6x222xf32>
    %26 = arith.mulf %24, %25 : vector<2x6x222xf32>
    %27 = arith.addf %21, %26 : vector<2x6x222xf32>
    %c0_22 = arith.constant 0 : index
    %c0_23 = arith.constant 0 : index
    %c17 = arith.constant 17 : index
    %28 = vector.load %arg3[%c0_22, %c0_23, %c17] : memref<2x3x256xf32, #tpu.memory_space<vmem>>, vector<2x1x222xf32>
    %c0_24 = arith.constant 0 : index
    %c0_25 = arith.constant 0 : index
    %c4 = arith.constant 4 : index
    %29 = vector.load %arg1[%c0_24, %c0_25, %c4] : memref<1x6x27xf32, #tpu.memory_space<vmem>>, vector<1x6x1xf32>
    %30 = vector.broadcast %29 : vector<1x6x1xf32> to vector<2x6x222xf32>
    %31 = vector.broadcast %28 : vector<2x1x222xf32> to vector<2x6x222xf32>
    %32 = arith.mulf %30, %31 : vector<2x6x222xf32>
    %33 = arith.addf %27, %32 : vector<2x6x222xf32>
    %c0_26 = arith.constant 0 : index
    %c0_27 = arith.constant 0 : index
    %c18 = arith.constant 18 : index
    %34 = vector.load %arg3[%c0_26, %c0_27, %c18] : memref<2x3x256xf32, #tpu.memory_space<vmem>>, vector<2x1x222xf32>
    %c0_28 = arith.constant 0 : index
    %c0_29 = arith.constant 0 : index
    %c5 = arith.constant 5 : index
    %35 = vector.load %arg1[%c0_28, %c0_29, %c5] : memref<1x6x27xf32, #tpu.memory_space<vmem>>, vector<1x6x1xf32>
    %36 = vector.broadcast %35 : vector<1x6x1xf32> to vector<2x6x222xf32>
    %37 = vector.broadcast %34 : vector<2x1x222xf32> to vector<2x6x222xf32>
    %38 = arith.mulf %36, %37 : vector<2x6x222xf32>
    %39 = arith.addf %33, %38 : vector<2x6x222xf32>
    %c0_30 = arith.constant 0 : index
    %c0_31 = arith.constant 0 : index
    %c32 = arith.constant 32 : index
    %40 = vector.load %arg3[%c0_30, %c0_31, %c32] : memref<2x3x256xf32, #tpu.memory_space<vmem>>, vector<2x1x222xf32>
    %c0_32 = arith.constant 0 : index
    %c0_33 = arith.constant 0 : index
    %c6 = arith.constant 6 : index
    %41 = vector.load %arg1[%c0_32, %c0_33, %c6] : memref<1x6x27xf32, #tpu.memory_space<vmem>>, vector<1x6x1xf32>
    %42 = vector.broadcast %41 : vector<1x6x1xf32> to vector<2x6x222xf32>
    %43 = vector.broadcast %40 : vector<2x1x222xf32> to vector<2x6x222xf32>
    %44 = arith.mulf %42, %43 : vector<2x6x222xf32>
    %45 = arith.addf %39, %44 : vector<2x6x222xf32>
    %c0_34 = arith.constant 0 : index
    %c0_35 = arith.constant 0 : index
    %c33 = arith.constant 33 : index
    %46 = vector.load %arg3[%c0_34, %c0_35, %c33] : memref<2x3x256xf32, #tpu.memory_space<vmem>>, vector<2x1x222xf32>
    %c0_36 = arith.constant 0 : index
    %c0_37 = arith.constant 0 : index
    %c7 = arith.constant 7 : index
    %47 = vector.load %arg1[%c0_36, %c0_37, %c7] : memref<1x6x27xf32, #tpu.memory_space<vmem>>, vector<1x6x1xf32>
    %48 = vector.broadcast %47 : vector<1x6x1xf32> to vector<2x6x222xf32>
    %49 = vector.broadcast %46 : vector<2x1x222xf32> to vector<2x6x222xf32>
    %50 = arith.mulf %48, %49 : vector<2x6x222xf32>
    %51 = arith.addf %45, %50 : vector<2x6x222xf32>
    %c0_38 = arith.constant 0 : index
    %c0_39 = arith.constant 0 : index
    %c34 = arith.constant 34 : index
    %52 = vector.load %arg3[%c0_38, %c0_39, %c34] : memref<2x3x256xf32, #tpu.memory_space<vmem>>, vector<2x1x222xf32>
    %c0_40 = arith.constant 0 : index
    %c0_41 = arith.constant 0 : index
    %c8 = arith.constant 8 : index
    %53 = vector.load %arg1[%c0_40, %c0_41, %c8] : memref<1x6x27xf32, #tpu.memory_space<vmem>>, vector<1x6x1xf32>
    %54 = vector.broadcast %53 : vector<1x6x1xf32> to vector<2x6x222xf32>
    %55 = vector.broadcast %52 : vector<2x1x222xf32> to vector<2x6x222xf32>
    %56 = arith.mulf %54, %55 : vector<2x6x222xf32>
    %57 = arith.addf %51, %56 : vector<2x6x222xf32>
    %c0_42 = arith.constant 0 : index
    %c1_43 = arith.constant 1 : index
    %c0_44 = arith.constant 0 : index
    %58 = vector.load %arg3[%c0_42, %c1_43, %c0_44] : memref<2x3x256xf32, #tpu.memory_space<vmem>>, vector<2x1x222xf32>
    %c0_45 = arith.constant 0 : index
    %c0_46 = arith.constant 0 : index
    %c9 = arith.constant 9 : index
    %59 = vector.load %arg1[%c0_45, %c0_46, %c9] : memref<1x6x27xf32, #tpu.memory_space<vmem>>, vector<1x6x1xf32>
    %60 = vector.broadcast %59 : vector<1x6x1xf32> to vector<2x6x222xf32>
    %61 = vector.broadcast %58 : vector<2x1x222xf32> to vector<2x6x222xf32>
    %62 = arith.mulf %60, %61 : vector<2x6x222xf32>
    %63 = arith.addf %57, %62 : vector<2x6x222xf32>
    %c0_47 = arith.constant 0 : index
    %c1_48 = arith.constant 1 : index
    %c1_49 = arith.constant 1 : index
    %64 = vector.load %arg3[%c0_47, %c1_48, %c1_49] : memref<2x3x256xf32, #tpu.memory_space<vmem>>, vector<2x1x222xf32>
    %c0_50 = arith.constant 0 : index
    %c0_51 = arith.constant 0 : index
    %c10 = arith.constant 10 : index
    %65 = vector.load %arg1[%c0_50, %c0_51, %c10] : memref<1x6x27xf32, #tpu.memory_space<vmem>>, vector<1x6x1xf32>
    %66 = vector.broadcast %65 : vector<1x6x1xf32> to vector<2x6x222xf32>
    %67 = vector.broadcast %64 : vector<2x1x222xf32> to vector<2x6x222xf32>
    %68 = arith.mulf %66, %67 : vector<2x6x222xf32>
    %69 = arith.addf %63, %68 : vector<2x6x222xf32>
    %c0_52 = arith.constant 0 : index
    %c1_53 = arith.constant 1 : index
    %c2_54 = arith.constant 2 : index
    %70 = vector.load %arg3[%c0_52, %c1_53, %c2_54] : memref<2x3x256xf32, #tpu.memory_space<vmem>>, vector<2x1x222xf32>
    %c0_55 = arith.constant 0 : index
    %c0_56 = arith.constant 0 : index
    %c11 = arith.constant 11 : index
    %71 = vector.load %arg1[%c0_55, %c0_56, %c11] : memref<1x6x27xf32, #tpu.memory_space<vmem>>, vector<1x6x1xf32>
    %72 = vector.broadcast %71 : vector<1x6x1xf32> to vector<2x6x222xf32>
    %73 = vector.broadcast %70 : vector<2x1x222xf32> to vector<2x6x222xf32>
    %74 = arith.mulf %72, %73 : vector<2x6x222xf32>
    %75 = arith.addf %69, %74 : vector<2x6x222xf32>
    %c0_57 = arith.constant 0 : index
    %c1_58 = arith.constant 1 : index
    %c16_59 = arith.constant 16 : index
    %76 = vector.load %arg3[%c0_57, %c1_58, %c16_59] : memref<2x3x256xf32, #tpu.memory_space<vmem>>, vector<2x1x222xf32>
    %c0_60 = arith.constant 0 : index
    %c0_61 = arith.constant 0 : index
    %c12 = arith.constant 12 : index
    %77 = vector.load %arg1[%c0_60, %c0_61, %c12] : memref<1x6x27xf32, #tpu.memory_space<vmem>>, vector<1x6x1xf32>
    %78 = vector.broadcast %77 : vector<1x6x1xf32> to vector<2x6x222xf32>
    %79 = vector.broadcast %76 : vector<2x1x222xf32> to vector<2x6x222xf32>
    %80 = arith.mulf %78, %79 : vector<2x6x222xf32>
    %81 = arith.addf %75, %80 : vector<2x6x222xf32>
    %c0_62 = arith.constant 0 : index
    %c1_63 = arith.constant 1 : index
    %c17_64 = arith.constant 17 : index
    %82 = vector.load %arg3[%c0_62, %c1_63, %c17_64] : memref<2x3x256xf32, #tpu.memory_space<vmem>>, vector<2x1x222xf32>
    %c0_65 = arith.constant 0 : index
    %c0_66 = arith.constant 0 : index
    %c13 = arith.constant 13 : index
    %83 = vector.load %arg1[%c0_65, %c0_66, %c13] : memref<1x6x27xf32, #tpu.memory_space<vmem>>, vector<1x6x1xf32>
    %84 = vector.broadcast %83 : vector<1x6x1xf32> to vector<2x6x222xf32>
    %85 = vector.broadcast %82 : vector<2x1x222xf32> to vector<2x6x222xf32>
    %86 = arith.mulf %84, %85 : vector<2x6x222xf32>
    %87 = arith.addf %81, %86 : vector<2x6x222xf32>
    %c0_67 = arith.constant 0 : index
    %c1_68 = arith.constant 1 : index
    %c18_69 = arith.constant 18 : index
    %88 = vector.load %arg3[%c0_67, %c1_68, %c18_69] : memref<2x3x256xf32, #tpu.memory_space<vmem>>, vector<2x1x222xf32>
    %c0_70 = arith.constant 0 : index
    %c0_71 = arith.constant 0 : index
    %c14 = arith.constant 14 : index
    %89 = vector.load %arg1[%c0_70, %c0_71, %c14] : memref<1x6x27xf32, #tpu.memory_space<vmem>>, vector<1x6x1xf32>
    %90 = vector.broadcast %89 : vector<1x6x1xf32> to vector<2x6x222xf32>
    %91 = vector.broadcast %88 : vector<2x1x222xf32> to vector<2x6x222xf32>
    %92 = arith.mulf %90, %91 : vector<2x6x222xf32>
    %93 = arith.addf %87, %92 : vector<2x6x222xf32>
    %c0_72 = arith.constant 0 : index
    %c1_73 = arith.constant 1 : index
    %c32_74 = arith.constant 32 : index
    %94 = vector.load %arg3[%c0_72, %c1_73, %c32_74] : memref<2x3x256xf32, #tpu.memory_space<vmem>>, vector<2x1x222xf32>
    %c0_75 = arith.constant 0 : index
    %c0_76 = arith.constant 0 : index
    %c15 = arith.constant 15 : index
    %95 = vector.load %arg1[%c0_75, %c0_76, %c15] : memref<1x6x27xf32, #tpu.memory_space<vmem>>, vector<1x6x1xf32>
    %96 = vector.broadcast %95 : vector<1x6x1xf32> to vector<2x6x222xf32>
    %97 = vector.broadcast %94 : vector<2x1x222xf32> to vector<2x6x222xf32>
    %98 = arith.mulf %96, %97 : vector<2x6x222xf32>
    %99 = arith.addf %93, %98 : vector<2x6x222xf32>
    %c0_77 = arith.constant 0 : index
    %c1_78 = arith.constant 1 : index
    %c33_79 = arith.constant 33 : index
    %100 = vector.load %arg3[%c0_77, %c1_78, %c33_79] : memref<2x3x256xf32, #tpu.memory_space<vmem>>, vector<2x1x222xf32>
    %c0_80 = arith.constant 0 : index
    %c0_81 = arith.constant 0 : index
    %c16_82 = arith.constant 16 : index
    %101 = vector.load %arg1[%c0_80, %c0_81, %c16_82] : memref<1x6x27xf32, #tpu.memory_space<vmem>>, vector<1x6x1xf32>
    %102 = vector.broadcast %101 : vector<1x6x1xf32> to vector<2x6x222xf32>
    %103 = vector.broadcast %100 : vector<2x1x222xf32> to vector<2x6x222xf32>
    %104 = arith.mulf %102, %103 : vector<2x6x222xf32>
    %105 = arith.addf %99, %104 : vector<2x6x222xf32>
    %c0_83 = arith.constant 0 : index
    %c1_84 = arith.constant 1 : index
    %c34_85 = arith.constant 34 : index
    %106 = vector.load %arg3[%c0_83, %c1_84, %c34_85] : memref<2x3x256xf32, #tpu.memory_space<vmem>>, vector<2x1x222xf32>
    %c0_86 = arith.constant 0 : index
    %c0_87 = arith.constant 0 : index
    %c17_88 = arith.constant 17 : index
    %107 = vector.load %arg1[%c0_86, %c0_87, %c17_88] : memref<1x6x27xf32, #tpu.memory_space<vmem>>, vector<1x6x1xf32>
    %108 = vector.broadcast %107 : vector<1x6x1xf32> to vector<2x6x222xf32>
    %109 = vector.broadcast %106 : vector<2x1x222xf32> to vector<2x6x222xf32>
    %110 = arith.mulf %108, %109 : vector<2x6x222xf32>
    %111 = arith.addf %105, %110 : vector<2x6x222xf32>
    %c0_89 = arith.constant 0 : index
    %c2_90 = arith.constant 2 : index
    %c0_91 = arith.constant 0 : index
    %112 = vector.load %arg3[%c0_89, %c2_90, %c0_91] : memref<2x3x256xf32, #tpu.memory_space<vmem>>, vector<2x1x222xf32>
    %c0_92 = arith.constant 0 : index
    %c0_93 = arith.constant 0 : index
    %c18_94 = arith.constant 18 : index
    %113 = vector.load %arg1[%c0_92, %c0_93, %c18_94] : memref<1x6x27xf32, #tpu.memory_space<vmem>>, vector<1x6x1xf32>
    %114 = vector.broadcast %113 : vector<1x6x1xf32> to vector<2x6x222xf32>
    %115 = vector.broadcast %112 : vector<2x1x222xf32> to vector<2x6x222xf32>
    %116 = arith.mulf %114, %115 : vector<2x6x222xf32>
    %117 = arith.addf %111, %116 : vector<2x6x222xf32>
    %c0_95 = arith.constant 0 : index
    %c2_96 = arith.constant 2 : index
    %c1_97 = arith.constant 1 : index
    %118 = vector.load %arg3[%c0_95, %c2_96, %c1_97] : memref<2x3x256xf32, #tpu.memory_space<vmem>>, vector<2x1x222xf32>
    %c0_98 = arith.constant 0 : index
    %c0_99 = arith.constant 0 : index
    %c19 = arith.constant 19 : index
    %119 = vector.load %arg1[%c0_98, %c0_99, %c19] : memref<1x6x27xf32, #tpu.memory_space<vmem>>, vector<1x6x1xf32>
    %120 = vector.broadcast %119 : vector<1x6x1xf32> to vector<2x6x222xf32>
    %121 = vector.broadcast %118 : vector<2x1x222xf32> to vector<2x6x222xf32>
    %122 = arith.mulf %120, %121 : vector<2x6x222xf32>
    %123 = arith.addf %117, %122 : vector<2x6x222xf32>
    %c0_100 = arith.constant 0 : index
    %c2_101 = arith.constant 2 : index
    %c2_102 = arith.constant 2 : index
    %124 = vector.load %arg3[%c0_100, %c2_101, %c2_102] : memref<2x3x256xf32, #tpu.memory_space<vmem>>, vector<2x1x222xf32>
    %c0_103 = arith.constant 0 : index
    %c0_104 = arith.constant 0 : index
    %c20 = arith.constant 20 : index
    %125 = vector.load %arg1[%c0_103, %c0_104, %c20] : memref<1x6x27xf32, #tpu.memory_space<vmem>>, vector<1x6x1xf32>
    %126 = vector.broadcast %125 : vector<1x6x1xf32> to vector<2x6x222xf32>
    %127 = vector.broadcast %124 : vector<2x1x222xf32> to vector<2x6x222xf32>
    %128 = arith.mulf %126, %127 : vector<2x6x222xf32>
    %129 = arith.addf %123, %128 : vector<2x6x222xf32>
    %c0_105 = arith.constant 0 : index
    %c2_106 = arith.constant 2 : index
    %c16_107 = arith.constant 16 : index
    %130 = vector.load %arg3[%c0_105, %c2_106, %c16_107] : memref<2x3x256xf32, #tpu.memory_space<vmem>>, vector<2x1x222xf32>
    %c0_108 = arith.constant 0 : index
    %c0_109 = arith.constant 0 : index
    %c21 = arith.constant 21 : index
    %131 = vector.load %arg1[%c0_108, %c0_109, %c21] : memref<1x6x27xf32, #tpu.memory_space<vmem>>, vector<1x6x1xf32>
    %132 = vector.broadcast %131 : vector<1x6x1xf32> to vector<2x6x222xf32>
    %133 = vector.broadcast %130 : vector<2x1x222xf32> to vector<2x6x222xf32>
    %134 = arith.mulf %132, %133 : vector<2x6x222xf32>
    %135 = arith.addf %129, %134 : vector<2x6x222xf32>
    %c0_110 = arith.constant 0 : index
    %c2_111 = arith.constant 2 : index
    %c17_112 = arith.constant 17 : index
    %136 = vector.load %arg3[%c0_110, %c2_111, %c17_112] : memref<2x3x256xf32, #tpu.memory_space<vmem>>, vector<2x1x222xf32>
    %c0_113 = arith.constant 0 : index
    %c0_114 = arith.constant 0 : index
    %c22 = arith.constant 22 : index
    %137 = vector.load %arg1[%c0_113, %c0_114, %c22] : memref<1x6x27xf32, #tpu.memory_space<vmem>>, vector<1x6x1xf32>
    %138 = vector.broadcast %137 : vector<1x6x1xf32> to vector<2x6x222xf32>
    %139 = vector.broadcast %136 : vector<2x1x222xf32> to vector<2x6x222xf32>
    %140 = arith.mulf %138, %139 : vector<2x6x222xf32>
    %141 = arith.addf %135, %140 : vector<2x6x222xf32>
    %c0_115 = arith.constant 0 : index
    %c2_116 = arith.constant 2 : index
    %c18_117 = arith.constant 18 : index
    %142 = vector.load %arg3[%c0_115, %c2_116, %c18_117] : memref<2x3x256xf32, #tpu.memory_space<vmem>>, vector<2x1x222xf32>
    %c0_118 = arith.constant 0 : index
    %c0_119 = arith.constant 0 : index
    %c23 = arith.constant 23 : index
    %143 = vector.load %arg1[%c0_118, %c0_119, %c23] : memref<1x6x27xf32, #tpu.memory_space<vmem>>, vector<1x6x1xf32>
    %144 = vector.broadcast %143 : vector<1x6x1xf32> to vector<2x6x222xf32>
    %145 = vector.broadcast %142 : vector<2x1x222xf32> to vector<2x6x222xf32>
    %146 = arith.mulf %144, %145 : vector<2x6x222xf32>
    %147 = arith.addf %141, %146 : vector<2x6x222xf32>
    %c0_120 = arith.constant 0 : index
    %c2_121 = arith.constant 2 : index
    %c32_122 = arith.constant 32 : index
    %148 = vector.load %arg3[%c0_120, %c2_121, %c32_122] : memref<2x3x256xf32, #tpu.memory_space<vmem>>, vector<2x1x222xf32>
    %c0_123 = arith.constant 0 : index
    %c0_124 = arith.constant 0 : index
    %c24 = arith.constant 24 : index
    %149 = vector.load %arg1[%c0_123, %c0_124, %c24] : memref<1x6x27xf32, #tpu.memory_space<vmem>>, vector<1x6x1xf32>
    %150 = vector.broadcast %149 : vector<1x6x1xf32> to vector<2x6x222xf32>
    %151 = vector.broadcast %148 : vector<2x1x222xf32> to vector<2x6x222xf32>
    %152 = arith.mulf %150, %151 : vector<2x6x222xf32>
    %153 = arith.addf %147, %152 : vector<2x6x222xf32>
    %c0_125 = arith.constant 0 : index
    %c2_126 = arith.constant 2 : index
    %c33_127 = arith.constant 33 : index
    %154 = vector.load %arg3[%c0_125, %c2_126, %c33_127] : memref<2x3x256xf32, #tpu.memory_space<vmem>>, vector<2x1x222xf32>
    %c0_128 = arith.constant 0 : index
    %c0_129 = arith.constant 0 : index
    %c25 = arith.constant 25 : index
    %155 = vector.load %arg1[%c0_128, %c0_129, %c25] : memref<1x6x27xf32, #tpu.memory_space<vmem>>, vector<1x6x1xf32>
    %156 = vector.broadcast %155 : vector<1x6x1xf32> to vector<2x6x222xf32>
    %157 = vector.broadcast %154 : vector<2x1x222xf32> to vector<2x6x222xf32>
    %158 = arith.mulf %156, %157 : vector<2x6x222xf32>
    %159 = arith.addf %153, %158 : vector<2x6x222xf32>
    %c0_130 = arith.constant 0 : index
    %c2_131 = arith.constant 2 : index
    %c34_132 = arith.constant 34 : index
    %160 = vector.load %arg3[%c0_130, %c2_131, %c34_132] : memref<2x3x256xf32, #tpu.memory_space<vmem>>, vector<2x1x222xf32>
    %c0_133 = arith.constant 0 : index
    %c0_134 = arith.constant 0 : index
    %c26 = arith.constant 26 : index
    %161 = vector.load %arg1[%c0_133, %c0_134, %c26] : memref<1x6x27xf32, #tpu.memory_space<vmem>>, vector<1x6x1xf32>
    %162 = vector.broadcast %161 : vector<1x6x1xf32> to vector<2x6x222xf32>
    %163 = vector.broadcast %160 : vector<2x1x222xf32> to vector<2x6x222xf32>
    %164 = arith.mulf %162, %163 : vector<2x6x222xf32>
    %165 = arith.addf %159, %164 : vector<2x6x222xf32>
    %c0_135 = arith.constant 0 : index
    %c0_136 = arith.constant 0 : index
    %c0_137 = arith.constant 0 : index
    %166 = vector.load %arg4[%c0_135, %c0_136, %c0_137] : memref<2x6x222xf32, #tpu.memory_space<vmem>>, vector<2x6x222xf32>
    tpu.vector_store %arg4[%c0_135, %c0_136, %c0_137], %165 {strides = array<i32>} : memref<2x6x222xf32, #tpu.memory_space<vmem>>, vector<2x6x222xf32>,
    return
  }
  func.func @transform_0(%arg0: i32) -> (i32, i32, i32) {
    %c0_i32 = arith.constant 0 : i32
    %c0_i32_0 = arith.constant 0 : i32
    %c0_i32_1 = arith.constant 0 : i32
    %c0_i32_2 = arith.constant 0 : i32
    return %c0_i32, %c0_i32_0, %c0_i32_1 : i32, i32, i32
  }
  func.func @transform_1(%arg0: i32) -> (i32, i32, i32) {
    %c0_i32 = arith.constant 0 : i32
    %c0_i32_0 = arith.constant 0 : i32
    %c0_i32_1 = arith.constant 0 : i32
    %c0_i32_2 = arith.constant 0 : i32
    return %c0_i32, %c0_i32_0, %c0_i32_1 : i32, i32, i32
  }
  func.func @transform_2(%arg0: i32) -> (i32, i32, i32) {
    %c0_i32 = arith.constant 0 : i32
    %c0_i32_0 = arith.constant 0 : i32
    %c0_i32_1 = arith.constant 0 : i32
    return %arg0, %c0_i32, %c0_i32_0 : i32, i32, i32
  }
  func.func @transform_3(%arg0: i32) -> (i32, i32, i32) {
    %c0_i32 = arith.constant 0 : i32
    %c0_i32_0 = arith.constant 0 : i32
    %c0_i32_1 = arith.constant 0 : i32
    return %arg0, %c0_i32, %c0_i32_0 : i32, i32, i32
  }
}

</mosaic_0001>

<llo_original>
// kernel: tpu_custom_call.1
$region0: #{tpu_custom_call.1}
  #allocation0 [shape = 'u32[]', space=smem, size = 0x4, offset = 0x4, fixed_abs, tag = 'smem constant byte address 0x4 - core index']
  #allocation1 [shape = 'u32[144,128]{1,0:T(1,128)}', space=vmem, size = 0x12000, scoped, tag = 'internal scratch']
  %s0 = inlined_call_operand.vmem [shape: f32[1,6,27], index: 0, kind: input, shape index: {}]
  %s1 = inlined_call_operand.vmem [shape: f32[1,6,1], index: 1, kind: input, shape index: {}]
  %s2 = inlined_call_operand.vmem [shape: f32[2,3,256], index: 2, kind: input, shape index: {}]
  %s3 = inlined_call_operand.vmem [shape: f32[2,6,222], index: 3, kind: output, shape index: {}]
  %s4 = sld [smem:[#allocation0]]
  $region22: #{tpu_custom_call.1} parent=0
    _
  %s6 = ssub.s32 1, %s4
  %s7 = scalar_select 0, %s6, %s4
  // Predicated region
  $region2: #{tpu_custom_call.1} parent=0 // pred_check
    _
  $region3: #{tpu_custom_call.1} parent=0 // pred_check_branch
    %9 = sbr.rel (0) target = $region5
  $region4: #{tpu_custom_call.1} parent=0 // pred_region
    _
  $region5: #{tpu_custom_call.1} parent=0 // pred_fallthru
    _
  // Predicated region
  $region6: #{tpu_custom_call.1} parent=0 // pred_check
    _
  $region7: #{tpu_custom_call.1} parent=0 // pred_check_branch
    %11 = sbr.rel (0) target = $region9
  $region8: #{tpu_custom_call.1} parent=0 // pred_region
    _
  $region9: #{tpu_custom_call.1} parent=0 // pred_fallthru
    _
  // Predicated region
  $region10: #{tpu_custom_call.1} parent=0 // pred_check
    _
  $region11: #{tpu_custom_call.1} parent=0 // pred_check_branch
    %13 = sbr.rel (0) target = $region13
  $region12: #{tpu_custom_call.1} parent=0 // pred_region
    _
  $region13: #{tpu_custom_call.1} parent=0 // pred_fallthru
    _
  %v14 = vld [vmem:[%s1] sm:$0x3f]
  %16 = vset.pattern.permute.xlu0 0
  %17 = vperm.xlu0 %16, %v14
  %v18 = vpop.permute.xlu0 %17
  %v20 = vadd.f32 %v18, 0.0
  %v21 = vld [vmem:[%s2] ss:$4 sm:$0x3]
  %s22 = scalar_lea.vmem %s2, 8
  %v23 = vld [vmem:[%s22] ss:$4 sm:$0x3]
  %v24 = vld [vmem:[%s0] sm:$0x3f]
  %26 = vset.pattern.permute.xlu0 0
  %27 = vperm.xlu0 %26, %v24
  %v28 = vpop.permute.xlu0 %27
  %v32 = vlaneseq
  %v33 = vshrl.u32 %v32, 7
  %v34 = vsub.s32 0, %v33
  %v35 = vrot.slane %v21, %v34
  %v36 = vlaneseq
  %v37 = vshrl.u32 %v36, 7
  %v38 = vsub.s32 1, %v37
  %v39 = vrot.slane %v21, %v38
  %v40 = vlaneseq
  %v41 = vshrl.u32 %v40, 7
  %v42 = vsub.s32 0, %v41
  %v43 = vrot.slane %v23, %v42
  %v44 = vlaneseq
  %v45 = vshrl.u32 %v44, 7
  %v46 = vsub.s32 1, %v45
  %v47 = vrot.slane %v23, %v46
  %v52 = vmul.f32 %v28, %v35
  %v53 = vmul.f32 %v28, %v39
  %v54 = vmul.f32 %v28, %v43
  %v55 = vmul.f32 %v28, %v47
  %v56 = vadd.f32 %v20, %v52
  %v57 = vadd.f32 %v20, %v53
  %v58 = vadd.f32 %v20, %v54
  %v59 = vadd.f32 %v20, %v55
  %60 = vset.pattern.permute.xlu0 1
  %61 = vperm.xlu0 %60, %v24
  %v62 = vpop.permute.xlu0 %61
  %v64 = vmul.f32 %v62, %v35
  %v65 = vmul.f32 %v62, %v39
  %v66 = vmul.f32 %v62, %v43
  %v67 = vmul.f32 %v62, %v47
  %72 = vrot.lane.b32.xlu0 %v64, 127
  %v73 = vpop.permute.xlu0 %72
  %74 = vrot.lane.b32.xlu0 %v65, 127
  %v75 = vpop.permute.xlu0 %74
  %76 = vrot.lane.b32.xlu0 %v66, 127
  %v77 = vpop.permute.xlu0 %76
  %78 = vrot.lane.b32.xlu0 %v67, 127
  %v79 = vpop.permute.xlu0 %78
  %vm80 = vcmask 1039360
  %v81 = vsel %vm80, %v73, %v75
  %v82 = vsel %vm80, %v77, %v79
  %v87 = vadd.f32 %v56, %v81
  %v88 = vadd.f32 %v57, %v75
  %v89 = vadd.f32 %v58, %v82
  %v90 = vadd.f32 %v59, %v79
  %91 = vset.pattern.permute.xlu0 2
  %92 = vperm.xlu0 %91, %v24
  %v93 = vpop.permute.xlu0 %92
  %v95 = vmul.f32 %v93, %v35
  %v96 = vmul.f32 %v93, %v39
  %v97 = vmul.f32 %v93, %v43
  %v98 = vmul.f32 %v93, %v47
  %103 = vrot.lane.b32.xlu0 %v95, 126
  %v104 = vpop.permute.xlu0 %103
  %105 = vrot.lane.b32.xlu0 %v96, 126
  %v106 = vpop.permute.xlu0 %105
  %107 = vrot.lane.b32.xlu0 %v97, 126
  %v108 = vpop.permute.xlu0 %107
  %109 = vrot.lane.b32.xlu0 %v98, 126
  %v110 = vpop.permute.xlu0 %109
  %vm111 = vcmask 1031168
  %v112 = vsel %vm111, %v104, %v106
  %v113 = vsel %vm111, %v108, %v110
  %v118 = vadd.f32 %v87, %v112
  %v119 = vadd.f32 %v88, %v106
  %v120 = vadd.f32 %v89, %v113
  %v121 = vadd.f32 %v90, %v110
  %122 = vset.pattern.permute.xlu0 3
  %123 = vperm.xlu0 %122, %v24
  %v124 = vpop.permute.xlu0 %123
  %v126 = vmul.f32 %v124, %v35
  %v127 = vmul.f32 %v124, %v39
  %v128 = vmul.f32 %v124, %v43
  %v129 = vmul.f32 %v124, %v47
  %134 = vrot.lane.b32.xlu0 %v126, 112
  %v135 = vpop.permute.xlu0 %134
  %136 = vrot.lane.b32.xlu0 %v127, 112
  %v137 = vpop.permute.xlu0 %136
  %138 = vrot.lane.b32.xlu0 %v128, 112
  %v139 = vpop.permute.xlu0 %138
  %140 = vrot.lane.b32.xlu0 %v129, 112
  %v141 = vpop.permute.xlu0 %140
  %vm142 = vcmask 916480
  %v143 = vsel %vm142, %v135, %v137
  %v144 = vsel %vm142, %v139, %v141
  %v149 = vadd.f32 %v118, %v143
  %v150 = vadd.f32 %v119, %v137
  %v151 = vadd.f32 %v120, %v144
  %v152 = vadd.f32 %v121, %v141
  %153 = vset.pattern.permute.xlu0 4
  %154 = vperm.xlu0 %153, %v24
  %v155 = vpop.permute.xlu0 %154
  %v157 = vmul.f32 %v155, %v35
  %v158 = vmul.f32 %v155, %v39
  %v159 = vmul.f32 %v155, %v43
  %v160 = vmul.f32 %v155, %v47
  %165 = vrot.lane.b32.xlu0 %v157, 111
  %v166 = vpop.permute.xlu0 %165
  %167 = vrot.lane.b32.xlu0 %v158, 111
  %v168 = vpop.permute.xlu0 %167
  %169 = vrot.lane.b32.xlu0 %v159, 111
  %v170 = vpop.permute.xlu0 %169
  %171 = vrot.lane.b32.xlu0 %v160, 111
  %v172 = vpop.permute.xlu0 %171
  %vm173 = vcmask 908288
  %v174 = vsel %vm173, %v166, %v168
  %v175 = vsel %vm173, %v170, %v172
  %v180 = vadd.f32 %v149, %v174
  %v181 = vadd.f32 %v150, %v168
  %v182 = vadd.f32 %v151, %v175
  %v183 = vadd.f32 %v152, %v172
  %184 = vset.pattern.permute.xlu0 5
  %185 = vperm.xlu0 %184, %v24
  %v186 = vpop.permute.xlu0 %185
  %v188 = vmul.f32 %v186, %v35
  %v189 = vmul.f32 %v186, %v39
  %v190 = vmul.f32 %v186, %v43
  %v191 = vmul.f32 %v186, %v47
  %196 = vrot.lane.b32.xlu0 %v188, 110
  %v197 = vpop.permute.xlu0 %196
  %198 = vrot.lane.b32.xlu0 %v189, 110
  %v199 = vpop.permute.xlu0 %198
  %200 = vrot.lane.b32.xlu0 %v190, 110
  %v201 = vpop.permute.xlu0 %200
  %202 = vrot.lane.b32.xlu0 %v191, 110
  %v203 = vpop.permute.xlu0 %202
  %vm204 = vcmask 900096
  %v205 = vsel %vm204, %v197, %v199
  %v206 = vsel %vm204, %v201, %v203
  %v211 = vadd.f32 %v180, %v205
  %v212 = vadd.f32 %v181, %v199
  %v213 = vadd.f32 %v182, %v206
  %v214 = vadd.f32 %v183, %v203
  %215 = vset.pattern.permute.xlu0 6
  %216 = vperm.xlu0 %215, %v24
  %v217 = vpop.permute.xlu0 %216
  %v219 = vmul.f32 %v217, %v35
  %v220 = vmul.f32 %v217, %v39
  %v221 = vmul.f32 %v217, %v43
  %v222 = vmul.f32 %v217, %v47
  %227 = vrot.lane.b32.xlu0 %v219, 96
  %v228 = vpop.permute.xlu0 %227
  %229 = vrot.lane.b32.xlu0 %v220, 96
  %v230 = vpop.permute.xlu0 %229
  %231 = vrot.lane.b32.xlu0 %v221, 96
  %v232 = vpop.permute.xlu0 %231
  %233 = vrot.lane.b32.xlu0 %v222, 96
  %v234 = vpop.permute.xlu0 %233
  %vm235 = vcmask 785408
  %v236 = vsel %vm235, %v228, %v230
  %v237 = vsel %vm235, %v232, %v234
  %v242 = vadd.f32 %v211, %v236
  %v243 = vadd.f32 %v212, %v230
  %v244 = vadd.f32 %v213, %v237
  %v245 = vadd.f32 %v214, %v234
  %246 = vset.pattern.permute.xlu0 7
  %247 = vperm.xlu0 %246, %v24
  %v248 = vpop.permute.xlu0 %247
  %v250 = vmul.f32 %v248, %v35
  %v251 = vmul.f32 %v248, %v39
  %v252 = vmul.f32 %v248, %v43
  %v253 = vmul.f32 %v248, %v47
  %258 = vrot.lane.b32.xlu0 %v250, 95
  %v259 = vpop.permute.xlu0 %258
  %260 = vrot.lane.b32.xlu0 %v251, 95
  %v261 = vpop.permute.xlu0 %260
  %262 = vrot.lane.b32.xlu0 %v252, 95
  %v263 = vpop.permute.xlu0 %262
  %264 = vrot.lane.b32.xlu0 %v253, 95
  %v265 = vpop.permute.xlu0 %264
  %vm266 = vcmask 777216
  %v267 = vsel %vm266, %v259, %v261
  %v268 = vsel %vm266, %v263, %v265
  %v273 = vadd.f32 %v242, %v267
  %v274 = vadd.f32 %v243, %v261
  %v275 = vadd.f32 %v244, %v268
  %v276 = vadd.f32 %v245, %v265
  %277 = vset.pattern.permute.xlu0 8
  %278 = vperm.xlu0 %277, %v24
  %v279 = vpop.permute.xlu0 %278
  %v281 = vmul.f32 %v279, %v35
  %v282 = vmul.f32 %v279, %v39
  %v283 = vmul.f32 %v279, %v43
  %v284 = vmul.f32 %v279, %v47
  %289 = vrot.lane.b32.xlu0 %v281, 94
  %v290 = vpop.permute.xlu0 %289
  %291 = vrot.lane.b32.xlu0 %v282, 94
  %v292 = vpop.permute.xlu0 %291
  %293 = vrot.lane.b32.xlu0 %v283, 94
  %v294 = vpop.permute.xlu0 %293
  %295 = vrot.lane.b32.xlu0 %v284, 94
  %v296 = vpop.permute.xlu0 %295
  %vm297 = vcmask 769024
  %v298 = vsel %vm297, %v290, %v292
  %v299 = vsel %vm297, %v294, %v296
  %v304 = vadd.f32 %v273, %v298
  %v305 = vadd.f32 %v274, %v292
  %v306 = vadd.f32 %v275, %v299
  %v307 = vadd.f32 %v276, %v296
  %s308 = scalar_lea.vmem %s2, 1
  %v309 = vld [vmem:[%s308] ss:$4 sm:$0x3]
  %s310 = scalar_lea.vmem %s2, 9
  %v311 = vld [vmem:[%s310] ss:$4 sm:$0x3]
  %312 = vset.pattern.permute.xlu0 9
  %313 = vperm.xlu0 %312, %v24
  %v314 = vpop.permute.xlu0 %313
  %v318 = vlaneseq
  %v319 = vshrl.u32 %v318, 7
  %v320 = vsub.s32 0, %v319
  %v321 = vrot.slane %v309, %v320
  %v322 = vlaneseq
  %v323 = vshrl.u32 %v322, 7
  %v324 = vsub.s32 1, %v323
  %v325 = vrot.slane %v309, %v324
  %v326 = vlaneseq
  %v327 = vshrl.u32 %v326, 7
  %v328 = vsub.s32 0, %v327
  %v329 = vrot.slane %v311, %v328
  %v330 = vlaneseq
  %v331 = vshrl.u32 %v330, 7
  %v332 = vsub.s32 1, %v331
  %v333 = vrot.slane %v311, %v332
  %v338 = vmul.f32 %v314, %v321
  %v339 = vmul.f32 %v314, %v325
  %v340 = vmul.f32 %v314, %v329
  %v341 = vmul.f32 %v314, %v333
  %v342 = vadd.f32 %v304, %v338
  %v343 = vadd.f32 %v305, %v339
  %v344 = vadd.f32 %v306, %v340
  %v345 = vadd.f32 %v307, %v341
  %346 = vset.pattern.permute.xlu0 10
  %347 = vperm.xlu0 %346, %v24
  %v348 = vpop.permute.xlu0 %347
  %v350 = vmul.f32 %v348, %v321
  %v351 = vmul.f32 %v348, %v325
  %v352 = vmul.f32 %v348, %v329
  %v353 = vmul.f32 %v348, %v333
  %358 = vrot.lane.b32.xlu0 %v350, 127
  %v359 = vpop.permute.xlu0 %358
  %360 = vrot.lane.b32.xlu0 %v351, 127
  %v361 = vpop.permute.xlu0 %360
  %362 = vrot.lane.b32.xlu0 %v352, 127
  %v363 = vpop.permute.xlu0 %362
  %364 = vrot.lane.b32.xlu0 %v353, 127
  %v365 = vpop.permute.xlu0 %364
  %v366 = vsel %vm80, %v359, %v361
  %v367 = vsel %vm80, %v363, %v365
  %v372 = vadd.f32 %v342, %v366
  %v373 = vadd.f32 %v343, %v361
  %v374 = vadd.f32 %v344, %v367
  %v375 = vadd.f32 %v345, %v365
  %376 = vset.pattern.permute.xlu0 11
  %377 = vperm.xlu0 %376, %v24
  %v378 = vpop.permute.xlu0 %377
  %v380 = vmul.f32 %v378, %v321
  %v381 = vmul.f32 %v378, %v325
  %v382 = vmul.f32 %v378, %v329
  %v383 = vmul.f32 %v378, %v333
  %388 = vrot.lane.b32.xlu0 %v380, 126
  %v389 = vpop.permute.xlu0 %388
  %390 = vrot.lane.b32.xlu0 %v381, 126
  %v391 = vpop.permute.xlu0 %390
  %392 = vrot.lane.b32.xlu0 %v382, 126
  %v393 = vpop.permute.xlu0 %392
  %394 = vrot.lane.b32.xlu0 %v383, 126
  %v395 = vpop.permute.xlu0 %394
  %v396 = vsel %vm111, %v389, %v391
  %v397 = vsel %vm111, %v393, %v395
  %v402 = vadd.f32 %v372, %v396
  %v403 = vadd.f32 %v373, %v391
  %v404 = vadd.f32 %v374, %v397
  %v405 = vadd.f32 %v375, %v395
  %406 = vset.pattern.permute.xlu0 12
  %407 = vperm.xlu0 %406, %v24
  %v408 = vpop.permute.xlu0 %407
  %v410 = vmul.f32 %v408, %v321
  %v411 = vmul.f32 %v408, %v325
  %v412 = vmul.f32 %v408, %v329
  %v413 = vmul.f32 %v408, %v333
  %418 = vrot.lane.b32.xlu0 %v410, 112
  %v419 = vpop.permute.xlu0 %418
  %420 = vrot.lane.b32.xlu0 %v411, 112
  %v421 = vpop.permute.xlu0 %420
  %422 = vrot.lane.b32.xlu0 %v412, 112
  %v423 = vpop.permute.xlu0 %422
  %424 = vrot.lane.b32.xlu0 %v413, 112
  %v425 = vpop.permute.xlu0 %424
  %v426 = vsel %vm142, %v419, %v421
  %v427 = vsel %vm142, %v423, %v425
  %v432 = vadd.f32 %v402, %v426
  %v433 = vadd.f32 %v403, %v421
  %v434 = vadd.f32 %v404, %v427
  %v435 = vadd.f32 %v405, %v425
  %436 = vset.pattern.permute.xlu0 13
  %437 = vperm.xlu0 %436, %v24
  %v438 = vpop.permute.xlu0 %437
  %v440 = vmul.f32 %v438, %v321
  %v441 = vmul.f32 %v438, %v325
  %v442 = vmul.f32 %v438, %v329
  %v443 = vmul.f32 %v438, %v333
  %448 = vrot.lane.b32.xlu0 %v440, 111
  %v449 = vpop.permute.xlu0 %448
  %450 = vrot.lane.b32.xlu0 %v441, 111
  %v451 = vpop.permute.xlu0 %450
  %452 = vrot.lane.b32.xlu0 %v442, 111
  %v453 = vpop.permute.xlu0 %452
  %454 = vrot.lane.b32.xlu0 %v443, 111
  %v455 = vpop.permute.xlu0 %454
  %v456 = vsel %vm173, %v449, %v451
  %v457 = vsel %vm173, %v453, %v455
  %v462 = vadd.f32 %v432, %v456
  %v463 = vadd.f32 %v433, %v451
  %v464 = vadd.f32 %v434, %v457
  %v465 = vadd.f32 %v435, %v455
  %466 = vset.pattern.permute.xlu0 14
  %467 = vperm.xlu0 %466, %v24
  %v468 = vpop.permute.xlu0 %467
  %v470 = vmul.f32 %v468, %v321
  %v471 = vmul.f32 %v468, %v325
  %v472 = vmul.f32 %v468, %v329
  %v473 = vmul.f32 %v468, %v333
  %478 = vrot.lane.b32.xlu0 %v470, 110
  %v479 = vpop.permute.xlu0 %478
  %480 = vrot.lane.b32.xlu0 %v471, 110
  %v481 = vpop.permute.xlu0 %480
  %482 = vrot.lane.b32.xlu0 %v472, 110
  %v483 = vpop.permute.xlu0 %482
  %484 = vrot.lane.b32.xlu0 %v473, 110
  %v485 = vpop.permute.xlu0 %484
  %v486 = vsel %vm204, %v479, %v481
  %v487 = vsel %vm204, %v483, %v485
  %v492 = vadd.f32 %v462, %v486
  %v493 = vadd.f32 %v463, %v481
  %v494 = vadd.f32 %v464, %v487
  %v495 = vadd.f32 %v465, %v485
  %496 = vset.pattern.permute.xlu0 15
  %497 = vperm.xlu0 %496, %v24
  %v498 = vpop.permute.xlu0 %497
  %v500 = vmul.f32 %v498, %v321
  %v501 = vmul.f32 %v498, %v325
  %v502 = vmul.f32 %v498, %v329
  %v503 = vmul.f32 %v498, %v333
  %508 = vrot.lane.b32.xlu0 %v500, 96
  %v509 = vpop.permute.xlu0 %508
  %510 = vrot.lane.b32.xlu0 %v501, 96
  %v511 = vpop.permute.xlu0 %510
  %512 = vrot.lane.b32.xlu0 %v502, 96
  %v513 = vpop.permute.xlu0 %512
  %514 = vrot.lane.b32.xlu0 %v503, 96
  %v515 = vpop.permute.xlu0 %514
  %v516 = vsel %vm235, %v509, %v511
  %v517 = vsel %vm235, %v513, %v515
  %v522 = vadd.f32 %v492, %v516
  %v523 = vadd.f32 %v493, %v511
  %v524 = vadd.f32 %v494, %v517
  %v525 = vadd.f32 %v495, %v515
  %526 = vset.pattern.permute.xlu0 16
  %527 = vperm.xlu0 %526, %v24
  %v528 = vpop.permute.xlu0 %527
  %v530 = vmul.f32 %v528, %v321
  %v531 = vmul.f32 %v528, %v325
  %v532 = vmul.f32 %v528, %v329
  %v533 = vmul.f32 %v528, %v333
  %538 = vrot.lane.b32.xlu0 %v530, 95
  %v539 = vpop.permute.xlu0 %538
  %540 = vrot.lane.b32.xlu0 %v531, 95
  %v541 = vpop.permute.xlu0 %540
  %542 = vrot.lane.b32.xlu0 %v532, 95
  %v543 = vpop.permute.xlu0 %542
  %544 = vrot.lane.b32.xlu0 %v533, 95
  %v545 = vpop.permute.xlu0 %544
  %v546 = vsel %vm266, %v539, %v541
  %v547 = vsel %vm266, %v543, %v545
  %v552 = vadd.f32 %v522, %v546
  %v553 = vadd.f32 %v523, %v541
  %v554 = vadd.f32 %v524, %v547
  %v555 = vadd.f32 %v525, %v545
  %556 = vset.pattern.permute.xlu0 17
  %557 = vperm.xlu0 %556, %v24
  %v558 = vpop.permute.xlu0 %557
  %v560 = vmul.f32 %v558, %v321
  %v561 = vmul.f32 %v558, %v325
  %v562 = vmul.f32 %v558, %v329
  %v563 = vmul.f32 %v558, %v333
  %568 = vrot.lane.b32.xlu0 %v560, 94
  %v569 = vpop.permute.xlu0 %568
  %570 = vrot.lane.b32.xlu0 %v561, 94
  %v571 = vpop.permute.xlu0 %570
  %572 = vrot.lane.b32.xlu0 %v562, 94
  %v573 = vpop.permute.xlu0 %572
  %574 = vrot.lane.b32.xlu0 %v563, 94
  %v575 = vpop.permute.xlu0 %574
  %v576 = vsel %vm297, %v569, %v571
  %v577 = vsel %vm297, %v573, %v575
  %v582 = vadd.f32 %v552, %v576
  %v583 = vadd.f32 %v553, %v571
  %v584 = vadd.f32 %v554, %v577
  %v585 = vadd.f32 %v555, %v575
  %s586 = scalar_lea.vmem %s2, 2
  %v587 = vld [vmem:[%s586] ss:$4 sm:$0x3]
  %s588 = scalar_lea.vmem %s2, 10
  %v589 = vld [vmem:[%s588] ss:$4 sm:$0x3]
  %590 = vset.pattern.permute.xlu0 18
  %591 = vperm.xlu0 %590, %v24
  %v592 = vpop.permute.xlu0 %591
  %v596 = vlaneseq
  %v597 = vshrl.u32 %v596, 7
  %v598 = vsub.s32 0, %v597
  %v599 = vrot.slane %v587, %v598
  %v600 = vlaneseq
  %v601 = vshrl.u32 %v600, 7
  %v602 = vsub.s32 1, %v601
  %v603 = vrot.slane %v587, %v602
  %v604 = vlaneseq
  %v605 = vshrl.u32 %v604, 7
  %v606 = vsub.s32 0, %v605
  %v607 = vrot.slane %v589, %v606
  %v608 = vlaneseq
  %v609 = vshrl.u32 %v608, 7
  %v610 = vsub.s32 1, %v609
  %v611 = vrot.slane %v589, %v610
  %v616 = vmul.f32 %v592, %v599
  %v617 = vmul.f32 %v592, %v603
  %v618 = vmul.f32 %v592, %v607
  %v619 = vmul.f32 %v592, %v611
  %v620 = vadd.f32 %v582, %v616
  %v621 = vadd.f32 %v583, %v617
  %v622 = vadd.f32 %v584, %v618
  %v623 = vadd.f32 %v585, %v619
  %624 = vset.pattern.permute.xlu0 19
  %625 = vperm.xlu0 %624, %v24
  %v626 = vpop.permute.xlu0 %625
  %v628 = vmul.f32 %v626, %v599
  %v629 = vmul.f32 %v626, %v603
  %v630 = vmul.f32 %v626, %v607
  %v631 = vmul.f32 %v626, %v611
  %636 = vrot.lane.b32.xlu0 %v628, 127
  %v637 = vpop.permute.xlu0 %636
  %638 = vrot.lane.b32.xlu0 %v629, 127
  %v639 = vpop.permute.xlu0 %638
  %640 = vrot.lane.b32.xlu0 %v630, 127
  %v641 = vpop.permute.xlu0 %640
  %642 = vrot.lane.b32.xlu0 %v631, 127
  %v643 = vpop.permute.xlu0 %642
  %v644 = vsel %vm80, %v637, %v639
  %v645 = vsel %vm80, %v641, %v643
  %v650 = vadd.f32 %v620, %v644
  %v651 = vadd.f32 %v621, %v639
  %v652 = vadd.f32 %v622, %v645
  %v653 = vadd.f32 %v623, %v643
  %654 = vset.pattern.permute.xlu0 20
  %655 = vperm.xlu0 %654, %v24
  %v656 = vpop.permute.xlu0 %655
  %v658 = vmul.f32 %v656, %v599
  %v659 = vmul.f32 %v656, %v603
  %v660 = vmul.f32 %v656, %v607
  %v661 = vmul.f32 %v656, %v611
  %666 = vrot.lane.b32.xlu0 %v658, 126
  %v667 = vpop.permute.xlu0 %666
  %668 = vrot.lane.b32.xlu0 %v659, 126
  %v669 = vpop.permute.xlu0 %668
  %670 = vrot.lane.b32.xlu0 %v660, 126
  %v671 = vpop.permute.xlu0 %670
  %672 = vrot.lane.b32.xlu0 %v661, 126
  %v673 = vpop.permute.xlu0 %672
  %v674 = vsel %vm111, %v667, %v669
  %v675 = vsel %vm111, %v671, %v673
  %v680 = vadd.f32 %v650, %v674
  %v681 = vadd.f32 %v651, %v669
  %v682 = vadd.f32 %v652, %v675
  %v683 = vadd.f32 %v653, %v673
  %684 = vset.pattern.permute.xlu0 21
  %685 = vperm.xlu0 %684, %v24
  %v686 = vpop.permute.xlu0 %685
  %v688 = vmul.f32 %v686, %v599
  %v689 = vmul.f32 %v686, %v603
  %v690 = vmul.f32 %v686, %v607
  %v691 = vmul.f32 %v686, %v611
  %696 = vrot.lane.b32.xlu0 %v688, 112
  %v697 = vpop.permute.xlu0 %696
  %698 = vrot.lane.b32.xlu0 %v689, 112
  %v699 = vpop.permute.xlu0 %698
  %700 = vrot.lane.b32.xlu0 %v690, 112
  %v701 = vpop.permute.xlu0 %700
  %702 = vrot.lane.b32.xlu0 %v691, 112
  %v703 = vpop.permute.xlu0 %702
  %v704 = vsel %vm142, %v697, %v699
  %v705 = vsel %vm142, %v701, %v703
  %v710 = vadd.f32 %v680, %v704
  %v711 = vadd.f32 %v681, %v699
  %v712 = vadd.f32 %v682, %v705
  %v713 = vadd.f32 %v683, %v703
  %714 = vset.pattern.permute.xlu0 22
  %715 = vperm.xlu0 %714, %v24
  %v716 = vpop.permute.xlu0 %715
  %v718 = vmul.f32 %v716, %v599
  %v719 = vmul.f32 %v716, %v603
  %v720 = vmul.f32 %v716, %v607
  %v721 = vmul.f32 %v716, %v611
  %726 = vrot.lane.b32.xlu0 %v718, 111
  %v727 = vpop.permute.xlu0 %726
  %728 = vrot.lane.b32.xlu0 %v719, 111
  %v729 = vpop.permute.xlu0 %728
  %730 = vrot.lane.b32.xlu0 %v720, 111
  %v731 = vpop.permute.xlu0 %730
  %732 = vrot.lane.b32.xlu0 %v721, 111
  %v733 = vpop.permute.xlu0 %732
  %v734 = vsel %vm173, %v727, %v729
  %v735 = vsel %vm173, %v731, %v733
  %v740 = vadd.f32 %v710, %v734
  %v741 = vadd.f32 %v711, %v729
  %v742 = vadd.f32 %v712, %v735
  %v743 = vadd.f32 %v713, %v733
  %744 = vset.pattern.permute.xlu0 23
  %745 = vperm.xlu0 %744, %v24
  %v746 = vpop.permute.xlu0 %745
  %v748 = vmul.f32 %v746, %v599
  %v749 = vmul.f32 %v746, %v603
  %v750 = vmul.f32 %v746, %v607
  %v751 = vmul.f32 %v746, %v611
  %756 = vrot.lane.b32.xlu0 %v748, 110
  %v757 = vpop.permute.xlu0 %756
  %758 = vrot.lane.b32.xlu0 %v749, 110
  %v759 = vpop.permute.xlu0 %758
  %760 = vrot.lane.b32.xlu0 %v750, 110
  %v761 = vpop.permute.xlu0 %760
  %762 = vrot.lane.b32.xlu0 %v751, 110
  %v763 = vpop.permute.xlu0 %762
  %v764 = vsel %vm204, %v757, %v759
  %v765 = vsel %vm204, %v761, %v763
  %v770 = vadd.f32 %v740, %v764
  %v771 = vadd.f32 %v741, %v759
  %v772 = vadd.f32 %v742, %v765
  %v773 = vadd.f32 %v743, %v763
  %774 = vset.pattern.permute.xlu0 24
  %775 = vperm.xlu0 %774, %v24
  %v776 = vpop.permute.xlu0 %775
  %v778 = vmul.f32 %v776, %v599
  %v779 = vmul.f32 %v776, %v603
  %v780 = vmul.f32 %v776, %v607
  %v781 = vmul.f32 %v776, %v611
  %786 = vrot.lane.b32.xlu0 %v778, 96
  %v787 = vpop.permute.xlu0 %786
  %788 = vrot.lane.b32.xlu0 %v779, 96
  %v789 = vpop.permute.xlu0 %788
  %790 = vrot.lane.b32.xlu0 %v780, 96
  %v791 = vpop.permute.xlu0 %790
  %792 = vrot.lane.b32.xlu0 %v781, 96
  %v793 = vpop.permute.xlu0 %792
  %v794 = vsel %vm235, %v787, %v789
  %v795 = vsel %vm235, %v791, %v793
  %v800 = vadd.f32 %v770, %v794
  %v801 = vadd.f32 %v771, %v789
  %v802 = vadd.f32 %v772, %v795
  %v803 = vadd.f32 %v773, %v793
  %804 = vset.pattern.permute.xlu0 25
  %805 = vperm.xlu0 %804, %v24
  %v806 = vpop.permute.xlu0 %805
  %v808 = vmul.f32 %v806, %v599
  %v809 = vmul.f32 %v806, %v603
  %v810 = vmul.f32 %v806, %v607
  %v811 = vmul.f32 %v806, %v611
  %816 = vrot.lane.b32.xlu0 %v808, 95
  %v817 = vpop.permute.xlu0 %816
  %818 = vrot.lane.b32.xlu0 %v809, 95
  %v819 = vpop.permute.xlu0 %818
  %820 = vrot.lane.b32.xlu0 %v810, 95
  %v821 = vpop.permute.xlu0 %820
  %822 = vrot.lane.b32.xlu0 %v811, 95
  %v823 = vpop.permute.xlu0 %822
  %v824 = vsel %vm266, %v817, %v819
  %v825 = vsel %vm266, %v821, %v823
  %v830 = vadd.f32 %v800, %v824
  %v831 = vadd.f32 %v801, %v819
  %v832 = vadd.f32 %v802, %v825
  %v833 = vadd.f32 %v803, %v823
  %834 = vset.pattern.permute.xlu0 26
  %835 = vperm.xlu0 %834, %v24
  %v836 = vpop.permute.xlu0 %835
  %v838 = vmul.f32 %v836, %v599
  %v839 = vmul.f32 %v836, %v603
  %v840 = vmul.f32 %v836, %v607
  %v841 = vmul.f32 %v836, %v611
  %846 = vrot.lane.b32.xlu0 %v838, 94
  %v847 = vpop.permute.xlu0 %846
  %848 = vrot.lane.b32.xlu0 %v839, 94
  %v849 = vpop.permute.xlu0 %848
  %850 = vrot.lane.b32.xlu0 %v840, 94
  %v851 = vpop.permute.xlu0 %850
  %852 = vrot.lane.b32.xlu0 %v841, 94
  %v853 = vpop.permute.xlu0 %852
  %v854 = vsel %vm297, %v847, %v849
  %v855 = vsel %vm297, %v851, %v853
  %v860 = vadd.f32 %v830, %v854
  %v861 = vadd.f32 %v831, %v849
  %v862 = vadd.f32 %v832, %v855
  %v863 = vadd.f32 %v833, %v853
  %864 = vst [vmem:[%s3] sm:$0x3f] %v860
  %vm865 = vcmask 766976
  %866 = vst.msk [vmem:[%s3 + $0x8] sm:$0x3f] %vm865, %v861
  %867 = vst [vmem:[%s3 + $0x10] sm:$0x3f] %v862
  %868 = vst.msk [vmem:[%s3 + $0x18] sm:$0x3f] %vm865, %v863
  // Predicated region
  $region14: #{tpu_custom_call.1} parent=0 // pred_check
    _
  $region15: #{tpu_custom_call.1} parent=0 // pred_check_branch
    %870 = sbr.rel (0) target = $region17
  $region16: #{tpu_custom_call.1} parent=0 // pred_region
    _
  $region17: #{tpu_custom_call.1} parent=0 // pred_fallthru
    _
  // Predicated region
  $region18: #{tpu_custom_call.1} parent=0 // pred_check
    _
  $region19: #{tpu_custom_call.1} parent=0 // pred_check_branch
    %872 = sbr.rel (0) target = $region21
  $region20: #{tpu_custom_call.1} parent=0 // pred_region
    _
  $region21: #{tpu_custom_call.1} parent=0 // pred_fallthru
    _

</llo_original>
